<compile_context>
chip_gen: v5e
topology: v5e:2x2
jax: 0.10.0
libtpu: 0.0.40
codegen_flags: <defaults>
</compile_context>

<pallas_src>
import jax
import jax.numpy as jnp
from jax.experimental import pallas as pl
from jax.experimental.pallas import tpu as pltpu

_PRED_LANES = 128  # lane-dense prediction output avoids masked vst.msk stores


def _make_kernel(temperature, has_style, compute_emb):
    """Build the fused softmax + argmax (+ probs @ W_content [+ W_style]) body."""

    def kernel(*refs):
        if compute_emb and has_style:
            (logits_ref, wc_ref, ws_ref,
             probs_ref, pred_ref, embc_ref, embs_ref) = refs
        elif compute_emb:
            logits_ref, wc_ref, probs_ref, pred_ref, embc_ref = refs
            ws_ref = embs_ref = None
        else:
            logits_ref, probs_ref, pred_ref = refs
            wc_ref = ws_ref = embc_ref = embs_ref = None

        logits = logits_ref[...].astype(jnp.float32)       # upcast in-register
        tm, v = logits.shape

        # argmax over vocab (special_mask is all ones -> the multiply is a no-op);
        # first occurrence of the max matches torch.max's argmax tie-break here.
        col = jax.lax.broadcasted_iota(jnp.int32, (tm, v), 1)
        row_max = jnp.max(logits, axis=-1, keepdims=True)
        idx = jnp.min(jnp.where(logits == row_max, col, v), axis=-1,
                      keepdims=True).astype(jnp.int32)      # (tm, 1)
        pred_ref[...] = jnp.broadcast_to(idx, pred_ref.shape)

        if temperature == 0.0:
            probs = logits              # torch branch: pred_probs = raw logits
        else:
            scaled = logits * (1.0 / temperature)
            m = jnp.max(scaled, axis=-1, keepdims=True)
            e = jnp.exp(scaled - m)
            denom = jnp.sum(e, axis=-1, keepdims=True)
            # EUP approx reciprocal (one op per row) + VPU multiply instead of a
            # per-element divide.
            probs = e * pl.reciprocal(denom, approx=True)
        probs_ref[...] = probs

        if compute_emb:
            # bf16 MXU operands, f32 accumulation.
            p16 = probs.astype(jnp.bfloat16)
            embc_ref[...] = jnp.dot(p16, wc_ref[...],
                                    preferred_element_type=jnp.float32)
            if has_style:
                embs_ref[...] = jnp.dot(p16, ws_ref[...],
                                        preferred_element_type=jnp.float32)

    return kernel


def _physical_vmem_bytes():
    try:
        return int(pltpu.get_tpu_info().vmem_capacity_bytes)
    except Exception:
        return 64 * 1024 * 1024     # conservative (v7x per-TC size)


def _row_bytes(V, d_total, logits_itemsize):
    # Per-row VMEM footprint with double buffering of every tiled operand.
    return (2 * logits_itemsize * V        # logits in
            + 2 * 4 * V                    # probs out (f32)
            + 2 * 4 * _PRED_LANES          # predictions out (i32)
            + 2 * 4 * d_total)             # embedding outs (f32)


def _choose_tile_m(M, V, d_total, logits_itemsize, budget_bytes):
    row = _row_bytes(V, d_total, logits_itemsize)
    weights = 2 * 2 * V * d_total          # bf16 weight tables (x2 buffers, cons.)
    avail = budget_bytes - weights
    if avail <= row * 8:
        tm = 8
    else:
        tm = (avail // row) // 8 * 8
    return int(M) if tm >= M else int(tm)


def target_simplex_forward(pred_logits, content_embed_weight,
                           style_embed_weight=None, temperature=1.0, st=False,
                           tile_m=None):
    """JAX/Pallas equivalent of TargetSimplex.forward.

    Returns ((source_pred_emb, target_pred_emb, softmax_pred_probs),
             predictions, pred_probs)
    """
    B, L, V = pred_logits.shape
    D = content_embed_weight.shape[1]
    Ds = style_embed_weight.shape[1] if style_embed_weight is not None else 0
    M = B * L
    logits2d = pred_logits.reshape(M, V)   # keep native dtype; upcast in kernel

    has_style = style_embed_weight is not None
    compute_emb = not st                   # st=True uses a row gather instead
    d_total = (D + Ds) if compute_emb else 0

    phys_vmem = _physical_vmem_bytes()
    budget = max(phys_vmem // 2 - (4 << 20), 16 << 20)
    if tile_m is not None:
        tm = int(min(M, tile_m))
        if tm < M:
            tm = max(8, (tm // 8) * 8)
    else:
        tm = _choose_tile_m(M, V, d_total, logits2d.dtype.itemsize, budget)
    grid = (pl.cdiv(M, tm),)

    in_specs = [pl.BlockSpec((tm, V), lambda i: (i, 0))]
    inputs = [logits2d]
    out_specs = [pl.BlockSpec((tm, V), lambda i: (i, 0)),             # probs
                 pl.BlockSpec((tm, _PRED_LANES), lambda i: (i, 0))]   # preds
    out_shapes = [jax.ShapeDtypeStruct((M, V), jnp.float32),
                  jax.ShapeDtypeStruct((M, _PRED_LANES), jnp.int32)]
    if compute_emb:
        in_specs.append(pl.BlockSpec((V, D), lambda i: (0, 0)))
        inputs.append(content_embed_weight.astype(jnp.bfloat16))
        out_specs.append(pl.BlockSpec((tm, D), lambda i: (i, 0)))
        out_shapes.append(jax.ShapeDtypeStruct((M, D), jnp.float32))
        if has_style:
            in_specs.append(pl.BlockSpec((V, Ds), lambda i: (0, 0)))
            inputs.append(style_embed_weight.astype(jnp.bfloat16))
            out_specs.append(pl.BlockSpec((tm, Ds), lambda i: (i, 0)))
            out_shapes.append(jax.ShapeDtypeStruct((M, Ds), jnp.float32))

    est_bytes = tm * _row_bytes(V, d_total, logits2d.dtype.itemsize) \
        + 2 * 2 * V * d_total
    vmem_limit = int(max(32 << 20,
                         min(phys_vmem - (8 << 20), est_bytes + (16 << 20))))

    kernel = _make_kernel(float(temperature), has_style, compute_emb)
    outs = pl.pallas_call(
        kernel,
        grid=grid,
        in_specs=in_specs,
        out_specs=tuple(out_specs),
        out_shape=tuple(out_shapes),
        compiler_params=pltpu.CompilerParams(
            dimension_semantics=("parallel",),     # rows independent -> megacore
            vmem_limit_bytes=vmem_limit),
    )(*inputs)

    probs2d, pred2d = outs[0], outs[1]
    softmax_pred_probs = probs2d.reshape(B, L, V)
    predictions = pred2d[:, 0].reshape(B, L)

    if st:
        # Forward value of the straight-through estimator: one-hot of the argmax.
        # The embeddings are then just gathered rows of the weight tables
        # (O(M*D)), never a materialized one-hot @ W matmul.
        # TODO(synk): no custom_vjp, so gradients do not follow the
        # `y_hard - probs.detach() + probs` trick if this path is differentiated.
        pred_probs = jax.nn.one_hot(predictions, V, dtype=jnp.float32)
        flat_idx = predictions.reshape(-1)
        source_pred_emb = jnp.take(content_embed_weight.astype(jnp.float32),
                                   flat_idx, axis=0).reshape(B, L, D)
        target_pred_emb = None
        if has_style:
            target_pred_emb = jnp.take(style_embed_weight.astype(jnp.float32),
                                       flat_idx, axis=0).reshape(B, L, Ds)
    else:
        pred_probs = softmax_pred_probs
        source_pred_emb = outs[2].reshape(B, L, D)
        target_pred_emb = outs[3].reshape(B, L, Ds) if has_style else None

    return ((source_pred_emb, target_pred_emb, softmax_pred_probs),
            predictions, pred_probs)


if __name__ == "__main__":
    # Small, TPU-tile-friendly shapes: batch=2, sent_length=8, vocab=256, dim=128
    B, L, V, D = 2, 8, 256, 128
    temperature = 1.0

    key = jax.random.PRNGKey(0)
    k_logits, k_content, k_style = jax.random.split(key, 3)

    pred_logits = jax.random.normal(k_logits, (B, L, V), dtype=jnp.float32)
    content_w = jax.random.normal(k_content, (V, D), dtype=jnp.float32) * 0.1
    style_w = jax.random.normal(k_style, (V, D), dtype=jnp.float32) * 0.1

    # --- st=False: fused softmax + argmax + both embedding matmuls ----------
    (src_emb, tgt_emb, sm_probs), predictions, pred_probs = jax.block_until_ready(
        target_simplex_forward(pred_logits, content_w, style_w,
                               temperature=temperature, st=False))

    # References (kernel feeds bf16 operands to the MXU with f32 accumulation).
    ref_probs = jax.nn.softmax(pred_logits / temperature, axis=-1)
    ref_probs2d = ref_probs.reshape(B * L, V)
    ref_src_bf16 = jnp.dot(ref_probs2d.astype(jnp.bfloat16),
                           content_w.astype(jnp.bfloat16),
                           preferred_element_type=jnp.float32).reshape(B, L, D)
    ref_tgt_bf16 = jnp.dot(ref_probs2d.astype(jnp.bfloat16),
                           style_w.astype(jnp.bfloat16),
                           preferred_element_type=jnp.float32).reshape(B, L, D)
    ref_src_f32 = jnp.einsum("blv,vd->bld", ref_probs, content_w)
    ref_tgt_f32 = jnp.einsum("blv,vd->bld", ref_probs, style_w)
    ref_pred = jnp.argmax(pred_logits, axis=-1).astype(jnp.int32)

    assert jnp.allclose(sm_probs, ref_probs, rtol=5e-3, atol=1e-5), "softmax mismatch"
    assert jnp.allclose(pred_probs, sm_probs), "pred_probs mismatch"
    assert jnp.array_equal(predictions, ref_pred), "argmax mismatch"
    assert jnp.allclose(src_emb, ref_src_bf16, atol=3e-4), "source emb mismatch"
    assert jnp.allclose(tgt_emb, ref_tgt_bf16, atol=3e-4), "target emb mismatch"
    assert jnp.allclose(src_emb, ref_src_f32, atol=2e-3), "source emb (f32 ref) mismatch"
    assert jnp.allclose(tgt_emb, ref_tgt_f32, atol=2e-3), "target emb (f32 ref) mismatch"

    # --- same computation with an explicit multi-step M grid ----------------
    (src_t, tgt_t, sm_t), pred_t, _ = jax.block_until_ready(
        target_simplex_forward(pred_logits, content_w, style_w,
                               temperature=temperature, st=False, tile_m=8))
    assert jnp.allclose(sm_t, sm_probs, atol=1e-6), "tiled softmax mismatch"
    assert jnp.allclose(src_t, src_emb, atol=1e-6), "tiled source emb mismatch"
    assert jnp.allclose(tgt_t, tgt_emb, atol=1e-6), "tiled target emb mismatch"
    assert jnp.array_equal(pred_t, predictions), "tiled argmax mismatch"

    # --- st=True: straight-through forward value via row gather -------------
    (src_st, tgt_st, sm_st), pred_st, pp_st = jax.block_until_ready(
        target_simplex_forward(pred_logits, content_w, style_w,
                               temperature=temperature, st=True))
    assert jnp.array_equal(pred_st, ref_pred), "st argmax mismatch"
    assert jnp.allclose(sm_st, ref_probs, rtol=5e-3, atol=1e-5), "st softmax mismatch"
    assert jnp.allclose(pp_st, jax.nn.one_hot(ref_pred, V, dtype=jnp.float32)), \
        "st pred_probs mismatch"
    assert jnp.allclose(src_st, content_w[ref_pred.reshape(-1)].reshape(B, L, D)), \
        "st source emb mismatch"
    assert jnp.allclose(tgt_st, style_w[ref_pred.reshape(-1)].reshape(B, L, D)), \
        "st target emb mismatch"

    print("KERNEL_OK")
</pallas_src>

<mosaic_0001>
module attributes {stable_mosaic.version = 11 : i64} {
  func.func @kernel(%arg0: i32, %arg1: memref<16x256xf32, #tpu.memory_space<vmem>>, %arg2: memref<256x128xbf16, #tpu.memory_space<vmem>>, %arg3: memref<256x128xbf16, #tpu.memory_space<vmem>>, %arg4: memref<16x256xf32, #tpu.memory_space<vmem>>, %arg5: memref<16x128xi32, #tpu.memory_space<vmem>>, %arg6: memref<16x128xf32, #tpu.memory_space<vmem>>, %arg7: memref<16x128xf32, #tpu.memory_space<vmem>>) attributes {dimension_semantics = [#tpu.dimension_semantics<parallel>], iteration_bounds = array<i64: 1>, scalar_prefetch = 0 : i64, scratch_operands = 0 : i64, tpu.core_type = #tpu.core_type<tc>, window_params = [{transform_indices = @transform_0, window_bounds = array<i64: 16, 256>}, {pipeline_mode = #tpu.pipeline_mode<synchronous>, transform_indices = @transform_1, window_bounds = array<i64: 256, 128>}, {pipeline_mode = #tpu.pipeline_mode<synchronous>, transform_indices = @transform_2, window_bounds = array<i64: 256, 128>}, {transform_indices = @transform_3, window_bounds = array<i64: 16, 256>}, {transform_indices = @transform_4, window_bounds = array<i64: 16, 128>}, {transform_indices = @transform_5, window_bounds = array<i64: 16, 128>}, {transform_indices = @transform_6, window_bounds = array<i64: 16, 128>}]} {
    %c0 = arith.constant 0 : index
    %c0_0 = arith.constant 0 : index
    %0 = vector.load %arg1[%c0, %c0_0] : memref<16x256xf32, #tpu.memory_space<vmem>>, vector<16x256xf32>
    %1 = tpu.iota {dimensions = array<i32: 1>} : vector<16x256xi32>
    %cst = arith.constant dense<0xFF800000> : vector<16xf32>
    %2 = vector.multi_reduction <maximumf>, %0, %cst [1] : vector<16x256xf32> to vector<16xf32>
    %3 = vector.shape_cast %2 : vector<16xf32> to vector<16x1xf32>
    %4 = vector.broadcast %3 : vector<16x1xf32> to vector<16x256xf32>
    %5 = arith.cmpf oeq, %0, %4 : vector<16x256xf32>
    %c256_i32 = arith.constant 256 : i32
    %6 = vector.broadcast %c256_i32 : i32 to vector<16x256xi32>
    %7 = arith.select %5, %1, %6 : vector<16x256xi1>, vector<16x256xi32>
    %cst_1 = arith.constant dense<2147483647> : vector<16xi32>
    %8 = vector.multi_reduction <minsi>, %7, %cst_1 [1] : vector<16x256xi32> to vector<16xi32>
    %9 = vector.shape_cast %8 : vector<16xi32> to vector<16x1xi32>
    %10 = vector.shape_cast %9 : vector<16x1xi32> to vector<16x1xi32>
    %11 = vector.broadcast %10 : vector<16x1xi32> to vector<16x128xi32>
    %c0_2 = arith.constant 0 : index
    %c0_3 = arith.constant 0 : index
    %12 = vector.load %arg5[%c0_2, %c0_3] : memref<16x128xi32, #tpu.memory_space<vmem>>, vector<16x128xi32>
    tpu.vector_store %arg5[%c0_2, %c0_3], %11 {strides = array<i32>} : memref<16x128xi32, #tpu.memory_space<vmem>>, vector<16x128xi32>,
    %cst_4 = arith.constant 1.000000e+00 : f32
    %13 = vector.broadcast %cst_4 : f32 to vector<16x256xf32>
    %14 = arith.mulf %0, %13 : vector<16x256xf32>
    %cst_5 = arith.constant dense<0xFF800000> : vector<16xf32>
    %15 = vector.multi_reduction <maximumf>, %14, %cst_5 [1] : vector<16x256xf32> to vector<16xf32>
    %16 = vector.shape_cast %15 : vector<16xf32> to vector<16x1xf32>
    %17 = vector.broadcast %16 : vector<16x1xf32> to vector<16x256xf32>
    %18 = arith.subf %14, %17 : vector<16x256xf32>
    %19 = math.exp %18 : vector<16x256xf32>
    %cst_6 = arith.constant dense<0.000000e+00> : vector<16xf32>
    %20 = vector.multi_reduction <add>, %19, %cst_6 [1] : vector<16x256xf32> to vector<16xf32>
    %21 = vector.shape_cast %20 : vector<16xf32> to vector<16x1xf32>
    %22 = tpu.reciprocal %21 {approx = true} : vector<16x1xf32> -> vector<16x1xf32>
    %23 = vector.broadcast %22 : vector<16x1xf32> to vector<16x256xf32>
    %24 = arith.mulf %19, %23 : vector<16x256xf32>
    %c0_7 = arith.constant 0 : index
    %c0_8 = arith.constant 0 : index
    %25 = vector.load %arg4[%c0_7, %c0_8] : memref<16x256xf32, #tpu.memory_space<vmem>>, vector<16x256xf32>
    tpu.vector_store %arg4[%c0_7, %c0_8], %24 {strides = array<i32>} : memref<16x256xf32, #tpu.memory_space<vmem>>, vector<16x256xf32>,
    %26 = arith.truncf %24 : vector<16x256xf32> to vector<16x256xbf16>
    %c0_9 = arith.constant 0 : index
    %c0_10 = arith.constant 0 : index
    %27 = vector.load %arg2[%c0_9, %c0_10] : memref<256x128xbf16, #tpu.memory_space<vmem>>, vector<256x128xbf16>
    %cst_11 = arith.constant dense<0.000000e+00> : vector<16x128xf32>
    %28 = tpu.matmul %26, %27, %cst_11 {dimension_numbers = #tpu.dot_dimension_numbers<[1], [0], [0], [1], [0, 0, 1, 1], [], []>} : vector<16x256xbf16>, vector<256x128xbf16>, vector<16x128xf32> -> vector<16x128xf32>
    %c0_12 = arith.constant 0 : index
    %c0_13 = arith.constant 0 : index
    %29 = vector.load %arg6[%c0_12, %c0_13] : memref<16x128xf32, #tpu.memory_space<vmem>>, vector<16x128xf32>
    tpu.vector_store %arg6[%c0_12, %c0_13], %28 {strides = array<i32>} : memref<16x128xf32, #tpu.memory_space<vmem>>, vector<16x128xf32>,
    %c0_14 = arith.constant 0 : index
    %c0_15 = arith.constant 0 : index
    %30 = vector.load %arg3[%c0_14, %c0_15] : memref<256x128xbf16, #tpu.memory_space<vmem>>, vector<256x128xbf16>
    %cst_16 = arith.constant dense<0.000000e+00> : vector<16x128xf32>
    %31 = tpu.matmul %26, %30, %cst_16 {dimension_numbers = #tpu.dot_dimension_numbers<[1], [0], [0], [1], [0, 0, 1, 1], [], []>} : vector<16x256xbf16>, vector<256x128xbf16>, vector<16x128xf32> -> vector<16x128xf32>
    %c0_17 = arith.constant 0 : index
    %c0_18 = arith.constant 0 : index
    %32 = vector.load %arg7[%c0_17, %c0_18] : memref<16x128xf32, #tpu.memory_space<vmem>>, vector<16x128xf32>
    tpu.vector_store %arg7[%c0_17, %c0_18], %31 {strides = array<i32>} : memref<16x128xf32, #tpu.memory_space<vmem>>, vector<16x128xf32>,
    return
  }
  func.func @transform_0(%arg0: i32) -> (i32, i32) {
    %c0_i32 = arith.constant 0 : i32
    %c0_i32_0 = arith.constant 0 : i32
    return %arg0, %c0_i32 : i32, i32
  }
  func.func @transform_1(%arg0: i32) -> (i32, i32) {
    %c0_i32 = arith.constant 0 : i32
    %c0_i32_0 = arith.constant 0 : i32
    %c0_i32_1 = arith.constant 0 : i32
    return %c0_i32, %c0_i32_0 : i32, i32
  }
  func.func @transform_2(%arg0: i32) -> (i32, i32) {
    %c0_i32 = arith.constant 0 : i32
    %c0_i32_0 = arith.constant 0 : i32
    %c0_i32_1 = arith.constant 0 : i32
    return %c0_i32, %c0_i32_0 : i32, i32
  }
  func.func @transform_3(%arg0: i32) -> (i32, i32) {
    %c0_i32 = arith.constant 0 : i32
    %c0_i32_0 = arith.constant 0 : i32
    return %arg0, %c0_i32 : i32, i32
  }
  func.func @transform_4(%arg0: i32) -> (i32, i32) {
    %c0_i32 = arith.constant 0 : i32
    %c0_i32_0 = arith.constant 0 : i32
    return %arg0, %c0_i32 : i32, i32
  }
  func.func @transform_5(%arg0: i32) -> (i32, i32) {
    %c0_i32 = arith.constant 0 : i32
    %c0_i32_0 = arith.constant 0 : i32
    return %arg0, %c0_i32 : i32, i32
  }
  func.func @transform_6(%arg0: i32) -> (i32, i32) {
    %c0_i32 = arith.constant 0 : i32
    %c0_i32_0 = arith.constant 0 : i32
    return %arg0, %c0_i32 : i32, i32
  }
}

</mosaic_0001>

<llo_original>
// kernel: tpu_custom_call.1
$region0: #{tpu_custom_call.1}
  #allocation0 [shape = 'u32[]', space=smem, size = 0x4, offset = 0x4, fixed_abs, tag = 'smem constant byte address 0x4 - core index']
  #allocation1 [shape = 'u32[72,128]{1,0:T(1,128)}', space=vmem, size = 0x9000, scoped, tag = 'internal scratch']
  %s0 = inlined_call_operand.hbm [shape: f32[16,256], index: 0, kind: input, shape index: {}]
  %s1 = inlined_call_operand.hbm [shape: bf16[256,128], index: 1, kind: input, shape index: {}]
  %s2 = inlined_call_operand.hbm [shape: bf16[256,128], index: 2, kind: input, shape index: {}]
  %s3 = inlined_call_operand.hbm [shape: f32[16,256], index: 3, kind: output, shape index: {0}]
  %s4 = inlined_call_operand.hbm [shape: s32[16,128], index: 4, kind: output, shape index: {1}]
  %s5 = inlined_call_operand.hbm [shape: f32[16,128], index: 5, kind: output, shape index: {2}]
  %s6 = inlined_call_operand.hbm [shape: f32[16,128], index: 6, kind: output, shape index: {3}]
  %7 = xla_tuple %s3, %s4, %s5, %s6
  %s8 = sld [smem:[#allocation0]]
  $region58: #{tpu_custom_call.1} parent=0
    _
  %s10 = ssub.s32 1, %s8
  %s11 = scalar_select 0, %s10, %s8
  $region1: #{tpu_custom_call.1} parent=0
    #allocation2 [shape = 'u8[16384]{0}', space=vmem, size = 0x4000, scoped, tag = 'input window, operand 0, single buffered']
    #allocation3 [shape = 's32[1]{0}', space=sflag, size = 0x4, scoped, tag = 'scoped memory for tpu_custom_call.1']
    #allocation4 [shape = 's32[1]{0}', space=sflag, size = 0x4, scoped, tag = 'scoped memory for tpu_custom_call.1']
    #allocation5 [shape = 'u8[65536]{0}', space=vmem, size = 0x10000, scoped, tag = 'input window, operand 1, single buffered']
    #allocation6 [shape = 's32[1]{0}', space=sflag, size = 0x4, scoped, tag = 'scoped memory for tpu_custom_call.1']
    #allocation7 [shape = 'u8[65536]{0}', space=vmem, size = 0x10000, scoped, tag = 'input window, operand 2, single buffered']
    #allocation8 [shape = 'u8[16384]{0}', space=vmem, size = 0x4000, scoped, tag = 'output window, operand 0, single buffered']
    #allocation9 [shape = 'u8[8192]{0}', space=vmem, size = 0x2000, scoped, tag = 'output window, operand 1, single buffered']
    #allocation10 [shape = 's32[1]{0}', space=sflag, size = 0x4, scoped, tag = 'scoped memory for tpu_custom_call.1']
    #allocation11 [shape = 'u8[8192]{0}', space=vmem, size = 0x2000, scoped, tag = 'output window, operand 2, single buffered']
    #allocation12 [shape = 'u8[8192]{0}', space=vmem, size = 0x2000, scoped, tag = 'output window, operand 3, single buffered']
    #allocation13 [shape = 's32[1]{0}', space=sflag, size = 0x4, scoped, tag = 'scoped memory for tpu_custom_call.1']
    %12 = vsyncpa [#allocation3], 0
    %13 = vsyncpa [#allocation6], 0
    %14 = vsyncpa [#allocation4], 0
    %15 = vsyncpa [#allocation10], 0
    %16 = vsyncpa [#allocation13], 0
    // Predicated region
    $region2: #{tpu_custom_call.1} parent=1 // pred_check
      _
    $region3: #{tpu_custom_call.1} parent=1 // pred_check_branch
      %18 = sbr.rel (0) target = $region5
    $region4: #{tpu_custom_call.1} parent=1 // pred_region
      %20 = vsyncadd [#allocation3], 0
      %s21 = sshll.u32 %s0, 4
      %s22 = int_to_ptr.hbm [resolvable:$true] %s21
      %s23 = sshll.u32 [#allocation2], 4
      %s24 = int_to_ptr.vmem [resolvable:$true] %s23
      %29 = dma.hbm_to_vmem [thread:$0]  %s22, 512, %s24, [#allocation3], 256, 256, 16
    $region5: #{tpu_custom_call.1} parent=1 // pred_fallthru
      _
    // Predicated region
    $region6: #{tpu_custom_call.1} parent=1 // pred_check
      _
    $region7: #{tpu_custom_call.1} parent=1 // pred_check_branch
      %31 = sbr.rel (0) target = $region9
    $region8: #{tpu_custom_call.1} parent=1 // pred_region
      %33 = vsyncadd [#allocation6], 0
      %s34 = sshll.u32 %s1, 4
      %s35 = int_to_ptr.hbm [resolvable:$true] %s34
      %s36 = sshll.u32 [#allocation5], 4
      %s37 = int_to_ptr.vmem [resolvable:$true] %s36
      %42 = dma.hbm_to_vmem [thread:$0]  %s35, 2048, %s37, [#allocation6], 64, 64, 4
    $region9: #{tpu_custom_call.1} parent=1 // pred_fallthru
      _
    // Predicated region
    $region10: #{tpu_custom_call.1} parent=1 // pred_check
      _
    $region11: #{tpu_custom_call.1} parent=1 // pred_check_branch
      %44 = sbr.rel (0) target = $region13
    $region12: #{tpu_custom_call.1} parent=1 // pred_region
      %46 = vsyncadd [#allocation6], 0
      %s47 = sshll.u32 %s2, 4
      %s48 = int_to_ptr.hbm [resolvable:$true] %s47
      %s49 = sshll.u32 [#allocation7], 4
      %s50 = int_to_ptr.vmem [resolvable:$true] %s49
      %55 = dma.hbm_to_vmem [thread:$0]  %s48, 2048, %s50, [#allocation6], 64, 64, 4
    $region13: #{tpu_custom_call.1} parent=1 // pred_fallthru
      _
    // Predicated region
    $region14: #{tpu_custom_call.1} parent=1 // pred_check
      _
    $region15: #{tpu_custom_call.1} parent=1 // pred_check_branch
      %57 = sbr.rel (0) target = $region17
    $region16: #{tpu_custom_call.1} parent=1 // pred_region
      %59 = dma.done [#allocation3], 512
    $region17: #{tpu_custom_call.1} parent=1 // pred_fallthru
      _
    // Predicated region
    $region18: #{tpu_custom_call.1} parent=1 // pred_check
      _
    $region19: #{tpu_custom_call.1} parent=1 // pred_check_branch
      %61 = sbr.rel (0) target = $region21
    $region20: #{tpu_custom_call.1} parent=1 // pred_region
      %63 = dma.done [#allocation6], 2048
    $region21: #{tpu_custom_call.1} parent=1 // pred_fallthru
      _
    // Predicated region
    $region22: #{tpu_custom_call.1} parent=1 // pred_check
      _
    $region23: #{tpu_custom_call.1} parent=1 // pred_check_branch
      %65 = sbr.rel (0) target = $region25
    $region24: #{tpu_custom_call.1} parent=1 // pred_region
      %67 = dma.done [#allocation6], 2048
    $region25: #{tpu_custom_call.1} parent=1 // pred_fallthru
      _
    %v68 = vld [vmem:[#allocation2] sm:$0xff]
    %v69 = vld [vmem:[#allocation2 + $0x8] sm:$0xff]
    %v70 = vld [vmem:[#allocation2 + $0x10] sm:$0xff]
    %v71 = vld [vmem:[#allocation2 + $0x18] sm:$0xff]
    %v72 = vlaneseq
    %v73 = vand.u32 %v72, 127
    %v74 = vadd.s32 %v73, 128
    %v75 = vmax.f32 %v68, %v69
    %76 = vmax.xlane.f32.xlu0 %v75
    %v77 = vpop.xlane.xlu0 %76
    %v78 = vmax.f32 %v70, %v71
    %79 = vmax.xlane.f32.xlu0 %v78
    %v80 = vpop.xlane.xlu0 %79
    %vm81 = vcmp.eq.f32.partialorder %v68, %v77
    %vm82 = vcmp.eq.f32.partialorder %v69, %v77
    %vm83 = vcmp.eq.f32.partialorder %v70, %v80
    %vm84 = vcmp.eq.f32.partialorder %v71, %v80
    %v85 = vsel %vm81, %v73, 256
    %v86 = vsel %vm82, %v74, 256
    %v87 = vsel %vm83, %v73, 256
    %v88 = vsel %vm84, %v74, 256
    %vm89 = vcmp.lt.s32.totalorder %v85, %v86
    %v90 = vsel %vm89, %v85, %v86
    %v91 = vand.u32 %v90, 65535
    %v92 = vshra.s32 %v90, 16
    %v93 = vcvt.s32.f32 %v91
    %v94 = vcvt.s32.f32 %v92
    %95 = vmin.xlane.f32.xlu0 %v94
    %v96 = vpop.xlane.xlu0 %95
    %vm97 = vcmp.eq.f32.partialorder %v94, %v96
    %v98 = vsel %vm97, %v93, inf
    %99 = vmin.xlane.f32.xlu0 %v98
    %v100 = vpop.xlane.xlu0 %99
    %v101 = vcvt.f32.s32 %v100
    %v102 = vcvt.f32.s32 %v96
    %v103 = vshll.u32 %v102, 16
    %v104 = vadd.s32 %v103, %v101
    %vm105 = vcmp.lt.s32.totalorder %v87, %v88
    %v106 = vsel %vm105, %v87, %v88
    %v107 = vand.u32 %v106, 65535
    %v108 = vshra.s32 %v106, 16
    %v109 = vcvt.s32.f32 %v107
    %v110 = vcvt.s32.f32 %v108
    %111 = vmin.xlane.f32.xlu0 %v110
    %v112 = vpop.xlane.xlu0 %111
    %vm113 = vcmp.eq.f32.partialorder %v110, %v112
    %v114 = vsel %vm113, %v109, inf
    %115 = vmin.xlane.f32.xlu0 %v114
    %v116 = vpop.xlane.xlu0 %115
    %v117 = vcvt.f32.s32 %v116
    %v118 = vcvt.f32.s32 %v112
    %v119 = vshll.u32 %v118, 16
    %v120 = vadd.s32 %v119, %v117
    %121 = vst [vmem:[#allocation9] sm:$0xff] %v104
    %122 = vst [vmem:[#allocation9 + $0x8] sm:$0xff] %v120
    %v123 = vsub.f32 %v68, %v77
    %v124 = vsub.f32 %v69, %v77
    %v125 = vsub.f32 %v70, %v80
    %v126 = vsub.f32 %v71, %v80
    %v127 = vmul.f32 %v123, 1.442695
    %v128 = vpow.pop %v127
    %v129 = vmul.f32 %v124, 1.442695
    %v130 = vpow.pop %v129
    %v131 = vmul.f32 %v125, 1.442695
    %v132 = vpow.pop %v131
    %v133 = vmul.f32 %v126, 1.442695
    %v134 = vpow.pop %v133
    %v135 = vadd.f32 %v128, %v130
    %136 = vadd.xlane.f32.xlu0 %v135
    %v137 = vpop.xlane.xlu0 %136
    %v138 = vadd.f32 %v132, %v134
    %139 = vadd.xlane.f32.xlu0 %v138
    %v140 = vpop.xlane.xlu0 %139
    %v141 = vrcp.pop %v137
    %v142 = vrcp.pop %v140
    %v143 = vmul.f32 %v128, %v141
    %v144 = vmul.f32 %v130, %v141
    %v145 = vmul.f32 %v132, %v142
    %v146 = vmul.f32 %v134, %v142
    %147 = vst [vmem:[#allocation8] sm:$0xff] %v143
    %148 = vst [vmem:[#allocation8 + $0x8] sm:$0xff] %v144
    %149 = vst [vmem:[#allocation8 + $0x10] sm:$0xff] %v145
    %150 = vst [vmem:[#allocation8 + $0x18] sm:$0xff] %v146
    %v151 = vpack.c.bf16 %v145, %v143
    %v152 = vpack.c.bf16 %v146, %v144
    %v153 = vld [vmem:[#allocation5] sm:$0xf]
    %v154 = vld [vmem:[#allocation5 + $0x4] sm:$0xf]
    %v155 = vld [vmem:[#allocation5 + $0x8] sm:$0xf]
    %v156 = vld [vmem:[#allocation5 + $0xc] sm:$0xf]
    %v157 = vld [vmem:[#allocation5 + $0x10] sm:$0xf]
    %v158 = vld [vmem:[#allocation5 + $0x14] sm:$0xf]
    %v159 = vld [vmem:[#allocation5 + $0x18] sm:$0xf]
    %v160 = vld [vmem:[#allocation5 + $0x1c] sm:$0xf]
    %v161 = vld [vmem:[#allocation5 + $0x20] sm:$0xf]
    %v162 = vld [vmem:[#allocation5 + $0x24] sm:$0xf]
    %v163 = vld [vmem:[#allocation5 + $0x28] sm:$0xf]
    %v164 = vld [vmem:[#allocation5 + $0x2c] sm:$0xf]
    %v165 = vld [vmem:[#allocation5 + $0x30] sm:$0xf]
    %v166 = vld [vmem:[#allocation5 + $0x34] sm:$0xf]
    %v167 = vld [vmem:[#allocation5 + $0x38] sm:$0xf]
    %v168 = vld [vmem:[#allocation5 + $0x3c] sm:$0xf]
    %v169 = vld [vmem:[#allocation5 + $0x40] sm:$0xf]
    %v170 = vld [vmem:[#allocation5 + $0x44] sm:$0xf]
    %v171 = vld [vmem:[#allocation5 + $0x48] sm:$0xf]
    %v172 = vld [vmem:[#allocation5 + $0x4c] sm:$0xf]
    %v173 = vld [vmem:[#allocation5 + $0x50] sm:$0xf]
    %v174 = vld [vmem:[#allocation5 + $0x54] sm:$0xf]
    %v175 = vld [vmem:[#allocation5 + $0x58] sm:$0xf]
    %v176 = vld [vmem:[#allocation5 + $0x5c] sm:$0xf]
    %v177 = vld [vmem:[#allocation5 + $0x60] sm:$0xf]
    %v178 = vld [vmem:[#allocation5 + $0x64] sm:$0xf]
    %v179 = vld [vmem:[#allocation5 + $0x68] sm:$0xf]
    %v180 = vld [vmem:[#allocation5 + $0x6c] sm:$0xf]
    %v181 = vld [vmem:[#allocation5 + $0x70] sm:$0xf]
    %v182 = vld [vmem:[#allocation5 + $0x74] sm:$0xf]
    %v183 = vld [vmem:[#allocation5 + $0x78] sm:$0xf]
    %v184 = vld [vmem:[#allocation5 + $0x7c] sm:$0xf]
    %v217 = vunpack.c.l.b16 %v153
    %v218 = vunpack.c.l.b16 %v154
    %v219 = vunpack.c.l.b16 %v155
    %v220 = vunpack.c.l.b16 %v156
    %v221 = vunpack.c.l.b16 %v157
    %v222 = vunpack.c.l.b16 %v158
    %v223 = vunpack.c.l.b16 %v159
    %v224 = vunpack.c.l.b16 %v160
    %v225 = vunpack.c.l.b16 %v161
    %v226 = vunpack.c.l.b16 %v162
    %v227 = vunpack.c.l.b16 %v163
    %v228 = vunpack.c.l.b16 %v164
    %v229 = vunpack.c.l.b16 %v165
    %v230 = vunpack.c.l.b16 %v166
    %v231 = vunpack.c.l.b16 %v167
    %v232 = vunpack.c.l.b16 %v168
    %v233 = vunpack.c.l.b16 %v169
    %v234 = vunpack.c.l.b16 %v170
    %v235 = vunpack.c.l.b16 %v171
    %v236 = vunpack.c.l.b16 %v172
    %v237 = vunpack.c.l.b16 %v173
    %v238 = vunpack.c.l.b16 %v174
    %v239 = vunpack.c.l.b16 %v175
    %v240 = vunpack.c.l.b16 %v176
    %v241 = vunpack.c.l.b16 %v177
    %v242 = vunpack.c.l.b16 %v178
    %v243 = vunpack.c.l.b16 %v179
    %v244 = vunpack.c.l.b16 %v180
    %v245 = vunpack.c.l.b16 %v181
    %v246 = vunpack.c.l.b16 %v182
    %v247 = vunpack.c.l.b16 %v183
    %v248 = vunpack.c.l.b16 %v184
    %v249 = vpack.c.b16 %v218, %v217
    %v250 = vpack.c.b16 %v220, %v219
    %v251 = vpack.c.b16 %v222, %v221
    %v252 = vpack.c.b16 %v224, %v223
    %v253 = vpack.c.b16 %v226, %v225
    %v254 = vpack.c.b16 %v228, %v227
    %v255 = vpack.c.b16 %v230, %v229
    %v256 = vpack.c.b16 %v232, %v231
    %v257 = vpack.c.b16 %v234, %v233
    %v258 = vpack.c.b16 %v236, %v235
    %v259 = vpack.c.b16 %v238, %v237
    %v260 = vpack.c.b16 %v240, %v239
    %v261 = vpack.c.b16 %v242, %v241
    %v262 = vpack.c.b16 %v244, %v243
    %v263 = vpack.c.b16 %v246, %v245
    %v264 = vpack.c.b16 %v248, %v247
    %281 = vmatpush.bf16.msra.mxu0 %v256
    %282 = vmatpush.bf16.msra.mxu0 %v255
    %283 = vmatpush.bf16.msra.mxu0 %v254
    %284 = vmatpush.bf16.msra.mxu0 %v253
    %285 = vmatpush.bf16.msra.mxu0 %v252
    %286 = vmatpush.bf16.msra.mxu0 %v251
    %287 = vmatpush.bf16.msra.mxu0 %v250
    %288 = vmatpush.bf16.msra.mxu0 %v249
    %289 = vmatmul.bf16.gmra.mxu0 %v151
    %v290 = vpop.f32.mrf.mxu0
    %v291 = vadd.f32 0.0, %v290
    %v292 = vpop.f32.mrf.mxu0
    %v293 = vadd.f32 0.0, %v292
    %294 = vdwg.mxu0
    %295 = vmatpush.bf16.msra.mxu0 %v264
    %296 = vmatpush.bf16.msra.mxu0 %v263
    %297 = vmatpush.bf16.msra.mxu0 %v262
    %298 = vmatpush.bf16.msra.mxu0 %v261
    %299 = vmatpush.bf16.msra.mxu0 %v260
    %300 = vmatpush.bf16.msra.mxu0 %v259
    %301 = vmatpush.bf16.msra.mxu0 %v258
    %302 = vmatpush.bf16.msra.mxu0 %v257
    %303 = vmatmul.bf16.gmra.mxu0 %v152
    %v304 = vpop.f32.mrf.mxu0
    %v305 = vadd.f32 %v291, %v304
    %v306 = vpop.f32.mrf.mxu0
    %v307 = vadd.f32 %v293, %v306
    %308 = vdwg.mxu0
    %309 = vst [vmem:[#allocation11] sm:$0xff] %v305
    %310 = vst [vmem:[#allocation11 + $0x8] sm:$0xff] %v307
    %v311 = vld [vmem:[#allocation7] sm:$0xf]
    %v312 = vld [vmem:[#allocation7 + $0x4] sm:$0xf]
    %v313 = vld [vmem:[#allocation7 + $0x8] sm:$0xf]
    %v314 = vld [vmem:[#allocation7 + $0xc] sm:$0xf]
    %v315 = vld [vmem:[#allocation7 + $0x10] sm:$0xf]
    %v316 = vld [vmem:[#allocation7 + $0x14] sm:$0xf]
    %v317 = vld [vmem:[#allocation7 + $0x18] sm:$0xf]
    %v318 = vld [vmem:[#allocation7 + $0x1c] sm:$0xf]
    %v319 = vld [vmem:[#allocation7 + $0x20] sm:$0xf]
    %v320 = vld [vmem:[#allocation7 + $0x24] sm:$0xf]
    %v321 = vld [vmem:[#allocation7 + $0x28] sm:$0xf]
    %v322 = vld [vmem:[#allocation7 + $0x2c] sm:$0xf]
    %v323 = vld [vmem:[#allocation7 + $0x30] sm:$0xf]
    %v324 = vld [vmem:[#allocation7 + $0x34] sm:$0xf]
    %v325 = vld [vmem:[#allocation7 + $0x38] sm:$0xf]
    %v326 = vld [vmem:[#allocation7 + $0x3c] sm:$0xf]
    %v327 = vld [vmem:[#allocation7 + $0x40] sm:$0xf]
    %v328 = vld [vmem:[#allocation7 + $0x44] sm:$0xf]
    %v329 = vld [vmem:[#allocation7 + $0x48] sm:$0xf]
    %v330 = vld [vmem:[#allocation7 + $0x4c] sm:$0xf]
    %v331 = vld [vmem:[#allocation7 + $0x50] sm:$0xf]
    %v332 = vld [vmem:[#allocation7 + $0x54] sm:$0xf]
    %v333 = vld [vmem:[#allocation7 + $0x58] sm:$0xf]
    %v334 = vld [vmem:[#allocation7 + $0x5c] sm:$0xf]
    %v335 = vld [vmem:[#allocation7 + $0x60] sm:$0xf]
    %v336 = vld [vmem:[#allocation7 + $0x64] sm:$0xf]
    %v337 = vld [vmem:[#allocation7 + $0x68] sm:$0xf]
    %v338 = vld [vmem:[#allocation7 + $0x6c] sm:$0xf]
    %v339 = vld [vmem:[#allocation7 + $0x70] sm:$0xf]
    %v340 = vld [vmem:[#allocation7 + $0x74] sm:$0xf]
    %v341 = vld [vmem:[#allocation7 + $0x78] sm:$0xf]
    %v342 = vld [vmem:[#allocation7 + $0x7c] sm:$0xf]
    %v375 = vunpack.c.l.b16 %v311
    %v376 = vunpack.c.l.b16 %v312
    %v377 = vunpack.c.l.b16 %v313
    %v378 = vunpack.c.l.b16 %v314
    %v379 = vunpack.c.l.b16 %v315
    %v380 = vunpack.c.l.b16 %v316
    %v381 = vunpack.c.l.b16 %v317
    %v382 = vunpack.c.l.b16 %v318
    %v383 = vunpack.c.l.b16 %v319
    %v384 = vunpack.c.l.b16 %v320
    %v385 = vunpack.c.l.b16 %v321
    %v386 = vunpack.c.l.b16 %v322
    %v387 = vunpack.c.l.b16 %v323
    %v388 = vunpack.c.l.b16 %v324
    %v389 = vunpack.c.l.b16 %v325
    %v390 = vunpack.c.l.b16 %v326
    %v391 = vunpack.c.l.b16 %v327
    %v392 = vunpack.c.l.b16 %v328
    %v393 = vunpack.c.l.b16 %v329
    %v394 = vunpack.c.l.b16 %v330
    %v395 = vunpack.c.l.b16 %v331
    %v396 = vunpack.c.l.b16 %v332
    %v397 = vunpack.c.l.b16 %v333
    %v398 = vunpack.c.l.b16 %v334
    %v399 = vunpack.c.l.b16 %v335
    %v400 = vunpack.c.l.b16 %v336
    %v401 = vunpack.c.l.b16 %v337
    %v402 = vunpack.c.l.b16 %v338
    %v403 = vunpack.c.l.b16 %v339
    %v404 = vunpack.c.l.b16 %v340
    %v405 = vunpack.c.l.b16 %v341
    %v406 = vunpack.c.l.b16 %v342
    %v407 = vpack.c.b16 %v376, %v375
    %v408 = vpack.c.b16 %v378, %v377
    %v409 = vpack.c.b16 %v380, %v379
    %v410 = vpack.c.b16 %v382, %v381
    %v411 = vpack.c.b16 %v384, %v383
    %v412 = vpack.c.b16 %v386, %v385
    %v413 = vpack.c.b16 %v388, %v387
    %v414 = vpack.c.b16 %v390, %v389
    %v415 = vpack.c.b16 %v392, %v391
    %v416 = vpack.c.b16 %v394, %v393
    %v417 = vpack.c.b16 %v396, %v395
    %v418 = vpack.c.b16 %v398, %v397
    %v419 = vpack.c.b16 %v400, %v399
    %v420 = vpack.c.b16 %v402, %v401
    %v421 = vpack.c.b16 %v404, %v403
    %v422 = vpack.c.b16 %v406, %v405
    %439 = vmatpush.bf16.msra.mxu0 %v414
    %440 = vmatpush.bf16.msra.mxu0 %v413
    %441 = vmatpush.bf16.msra.mxu0 %v412
    %442 = vmatpush.bf16.msra.mxu0 %v411
    %443 = vmatpush.bf16.msra.mxu0 %v410
    %444 = vmatpush.bf16.msra.mxu0 %v409
    %445 = vmatpush.bf16.msra.mxu0 %v408
    %446 = vmatpush.bf16.msra.mxu0 %v407
    %447 = vmatmul.bf16.gmra.mxu0 %v151
    %v448 = vpop.f32.mrf.mxu0
    %v449 = vadd.f32 0.0, %v448
    %v450 = vpop.f32.mrf.mxu0
    %v451 = vadd.f32 0.0, %v450
    %452 = vdwg.mxu0
    %453 = vmatpush.bf16.msra.mxu0 %v422
    %454 = vmatpush.bf16.msra.mxu0 %v421
    %455 = vmatpush.bf16.msra.mxu0 %v420
    %456 = vmatpush.bf16.msra.mxu0 %v419
    %457 = vmatpush.bf16.msra.mxu0 %v418
    %458 = vmatpush.bf16.msra.mxu0 %v417
    %459 = vmatpush.bf16.msra.mxu0 %v416
    %460 = vmatpush.bf16.msra.mxu0 %v415
    %461 = vmatmul.bf16.gmra.mxu0 %v152
    %v462 = vpop.f32.mrf.mxu0
    %v463 = vadd.f32 %v449, %v462
    %v464 = vpop.f32.mrf.mxu0
    %v465 = vadd.f32 %v451, %v464
    %466 = vdwg.mxu0
    %467 = vst [vmem:[#allocation12] sm:$0xff] %v463
    %468 = vst [vmem:[#allocation12 + $0x8] sm:$0xff] %v465
    // Predicated region
    $region26: #{tpu_custom_call.1} parent=1 // pred_check
      _
    $region27: #{tpu_custom_call.1} parent=1 // pred_check_branch
      %470 = sbr.rel (0) target = $region29
    $region28: #{tpu_custom_call.1} parent=1 // pred_region
      %472 = vsyncadd [#allocation4], 0
      %s473 = sshll.u32 [#allocation8], 4
      %s474 = int_to_ptr.vmem [resolvable:$true] %s473
      %s475 = sshll.u32 %s3, 4
      %s476 = int_to_ptr.hbm [resolvable:$true] %s475
      %481 = dma.vmem_to_hbm [thread:$0]  %s474, 512, %s476, [#allocation4], 256, 256, 16
    $region29: #{tpu_custom_call.1} parent=1 // pred_fallthru
      _
    // Predicated region
    $region30: #{tpu_custom_call.1} parent=1 // pred_check
      _
    $region31: #{tpu_custom_call.1} parent=1 // pred_check_branch
      %483 = sbr.rel (0) target = $region33
    $region32: #{tpu_custom_call.1} parent=1 // pred_region
      %485 = vsyncadd [#allocation10], 0
      %s486 = sshll.u32 [#allocation9], 4
      %s487 = int_to_ptr.vmem [resolvable:$true] %s486
      %s488 = sshll.u32 %s4, 4
      %s489 = int_to_ptr.hbm [resolvable:$true] %s488
      %494 = dma.vmem_to_hbm [thread:$0]  %s487, 256, %s489, [#allocation10], 128, 128, 8
    $region33: #{tpu_custom_call.1} parent=1 // pred_fallthru
      _
    // Predicated region
    $region34: #{tpu_custom_call.1} parent=1 // pred_check
      _
    $region35: #{tpu_custom_call.1} parent=1 // pred_check_branch
      %496 = sbr.rel (0) target = $region37
    $region36: #{tpu_custom_call.1} parent=1 // pred_region
      %498 = vsyncadd [#allocation10], 0
      %s499 = sshll.u32 [#allocation11], 4
      %s500 = int_to_ptr.vmem [resolvable:$true] %s499
      %s501 = sshll.u32 %s5, 4
      %s502 = int_to_ptr.hbm [resolvable:$true] %s501
      %507 = dma.vmem_to_hbm [thread:$0]  %s500, 256, %s502, [#allocation10], 128, 128, 8
    $region37: #{tpu_custom_call.1} parent=1 // pred_fallthru
      _
    // Predicated region
    $region38: #{tpu_custom_call.1} parent=1 // pred_check
      _
    $region39: #{tpu_custom_call.1} parent=1 // pred_check_branch
      %509 = sbr.rel (0) target = $region41
    $region40: #{tpu_custom_call.1} parent=1 // pred_region
      %511 = vsyncadd [#allocation13], 0
      %s512 = sshll.u32 [#allocation12], 4
      %s513 = int_to_ptr.vmem [resolvable:$true] %s512
      %s514 = sshll.u32 %s6, 4
      %s515 = int_to_ptr.hbm [resolvable:$true] %s514
      %520 = dma.vmem_to_hbm [thread:$0]  %s513, 256, %s515, [#allocation13], 128, 128, 8
    $region41: #{tpu_custom_call.1} parent=1 // pred_fallthru
      _
    // Predicated region
    $region42: #{tpu_custom_call.1} parent=1 // pred_check
      _
    $region43: #{tpu_custom_call.1} parent=1 // pred_check_branch
      %522 = sbr.rel (0) target = $region45
    $region44: #{tpu_custom_call.1} parent=1 // pred_region
      %524 = dma.done [#allocation4], 512
    $region45: #{tpu_custom_call.1} parent=1 // pred_fallthru
      _
    // Predicated region
    $region46: #{tpu_custom_call.1} parent=1 // pred_check
      _
    $region47: #{tpu_custom_call.1} parent=1 // pred_check_branch
      %526 = sbr.rel (0) target = $region49
    $region48: #{tpu_custom_call.1} parent=1 // pred_region
      %528 = dma.done [#allocation10], 256
    $region49: #{tpu_custom_call.1} parent=1 // pred_fallthru
      _
    // Predicated region
    $region50: #{tpu_custom_call.1} parent=1 // pred_check
      _
    $region51: #{tpu_custom_call.1} parent=1 // pred_check_branch
      %530 = sbr.rel (0) target = $region53
    $region52: #{tpu_custom_call.1} parent=1 // pred_region
      %532 = dma.done [#allocation10], 256
    $region53: #{tpu_custom_call.1} parent=1 // pred_fallthru
      _
    // Predicated region
    $region54: #{tpu_custom_call.1} parent=1 // pred_check
      _
    $region55: #{tpu_custom_call.1} parent=1 // pred_check_branch
      %534 = sbr.rel (0) target = $region57
    $region56: #{tpu_custom_call.1} parent=1 // pred_region
      %536 = dma.done [#allocation13], 256
    $region57: #{tpu_custom_call.1} parent=1 // pred_fallthru
      _
    %537 = vsyncpa [#allocation3], 1
    %538 = vsyncpa [#allocation6], 1
    %539 = vsyncpa [#allocation4], 1
    %540 = vsyncpa [#allocation10], 1
    %541 = vsyncpa [#allocation13], 1

</llo_original>
